<compile_context>
chip_gen: v7x
topology: tpu7x:2x2x1
jax: 0.10.0
libtpu: 0.0.40
codegen_flags: <defaults>
</compile_context>

<pallas_src>
import functools

import jax
import jax.numpy as jnp
from jax import lax
from jax.experimental import pallas as pl
from jax.experimental.pallas import tpu as pltpu

_LANE = 1024     # lane-dense last dim (multiple of 128) -> unmasked full-vreg stores
_TILE_R = 512    # 512 x 1024 x 4B = 2 MiB per f32 buffer


def _static_dropout_kernel(seed_ref, x_ref, o_ref, *, threshold, scale):
    """Elementwise inverted dropout; mask from a counter-based hash (lowbias32)."""
    r, c = x_ref.shape
    i = pl.program_id(0)

    # Global element index of every element of this tile (wraps for >2^31 elems,
    # which is fine — it is only a hash input).
    row_ids = lax.broadcasted_iota(jnp.int32, (r, c), 0)
    col_ids = lax.broadcasted_iota(jnp.int32, (r, c), 1)
    idx = ((i * r + row_ids) * c + col_ids).astype(jnp.uint32)

    # lowbias32-style integer hash, keyed by the seed.
    seed_u = seed_ref[0].astype(jnp.uint32)
    h = idx ^ (seed_u * jnp.uint32(0x9E3779B9))
    h = h ^ (h >> 16)
    h = h * jnp.uint32(0x7FEB352D)
    h = h ^ (h >> 15)
    h = h * jnp.uint32(0x846CA68B)
    h = h ^ (h >> 16)

    keep = h < jnp.uint32(threshold)          # P(keep) = (1 - p)

    x = x_ref[...]
    scale_c = jnp.asarray(scale, dtype=x.dtype)   # bf16 stays bf16, f32 stays f32
    o_ref[...] = jnp.where(keep, x * scale_c, jnp.zeros_like(x))


def static_dropout(x, seed, p=0.5, training=True):
    """Pallas implementation of StaticDropout.forward (noise regenerated each call)."""
    if p < 0.0 or p > 1.0:
        raise ValueError(
            "dropout probability has to be between 0 and 1, but got {}".format(p)
        )
    # Fast paths: never touch HBM through the kernel for these.
    if not training or p == 0.0:
        return x
    if p == 1.0:
        return jnp.zeros_like(x)

    orig_shape = x.shape
    n = x.size

    # Lane-dense slab: flatten to 1-D, pad to a multiple of _LANE, view as
    # (rows, _LANE). Dropout is elementwise so this is pure layout plumbing.
    rows = -(-n // _LANE)
    if rows <= _TILE_R:
        tile_r = rows                       # full-extent block (no (8,128) issue)
        rows_pad = rows
    else:
        tile_r = _TILE_R
        rows_pad = -(-rows // _TILE_R) * _TILE_R   # every tile full
    n_pad = rows_pad * _LANE

    x_flat = jnp.ravel(x)
    if n_pad != n:
        x_flat = jnp.pad(x_flat, (0, n_pad - n))
    x2 = x_flat.reshape(rows_pad, _LANE)

    # keep iff hash < (1 - p) * 2^32  (exact integer threshold, no float uniform)
    threshold = min(int(round((1.0 - float(p)) * 4294967296.0)), 4294967295)
    scale = 1.0 / (1.0 - float(p))
    seed_arr = jnp.asarray([seed], dtype=jnp.int32)

    grid = (rows_pad // tile_r,)
    out = pl.pallas_call(
        functools.partial(_static_dropout_kernel, threshold=threshold, scale=scale),
        out_shape=jax.ShapeDtypeStruct((rows_pad, _LANE), x.dtype),
        grid_spec=pltpu.PrefetchScalarGridSpec(
            num_scalar_prefetch=1,          # seed lands in SMEM
            grid=grid,
            in_specs=[pl.BlockSpec((tile_r, _LANE), lambda i, seed_ref: (i, 0))],
            out_specs=pl.BlockSpec((tile_r, _LANE), lambda i, seed_ref: (i, 0)),
        ),
        compiler_params=pltpu.CompilerParams(
            dimension_semantics=("parallel",),   # shard tiles across v7x's 2 TCs
        ),
    )(seed_arr, x2)

    return out.reshape(-1)[:n].reshape(orig_shape)


if __name__ == "__main__":
    key = jax.random.PRNGKey(0)
    # (seq=8, batch=2, hidden=32) — OpenNMT time-major convention.
    x = jax.random.normal(key, (8, 2, 32), dtype=jnp.float32)

    p = 0.5
    y = jax.block_until_ready(static_dropout(x, seed=1234, p=p, training=True))

    # Every output element is either 0 or input / (1 - p).
    scaled = x / (1.0 - p)
    ok_mask = jnp.isclose(y, 0.0, atol=1e-8) | jnp.isclose(y, scaled, rtol=1e-5, atol=1e-6)
    assert bool(jnp.all(ok_mask)), "dropout output values not in {0, x/(1-p)}"

    # Keep-rate sanity (should be ~0.5 at p=0.5).
    zero_frac = float(jnp.mean((y == 0.0).astype(jnp.float32)))
    assert 0.2 < zero_frac < 0.8, f"suspicious drop fraction {zero_frac}"

    # Eval mode is identity.
    y_eval = jax.block_until_ready(static_dropout(x, seed=1234, p=p, training=False))
    assert bool(jnp.allclose(y_eval, x)), "eval mode must be identity"

    # p == 1 -> zeros, p == 0 -> identity (wrapper fast paths).
    y1 = jax.block_until_ready(static_dropout(x, seed=7, p=1.0, training=True))
    assert bool(jnp.all(y1 == 0.0)), "p=1 must zero the output"
    y0 = jax.block_until_ready(static_dropout(x, seed=7, p=0.0, training=True))
    assert bool(jnp.allclose(y0, x)), "p=0 must be identity"

    print("KERNEL_OK")
</pallas_src>

<mosaic_0001>
module attributes {stable_mosaic.version = 11 : i64} {
  func.func @_static_dropout_kernel(%arg0: i32, %arg1: memref<1xi32, #tpu.memory_space<smem>>, %arg2: memref<1x1024xf32, #tpu.memory_space<vmem>>, %arg3: memref<1x1024xf32, #tpu.memory_space<vmem>>) attributes {dimension_semantics = [#tpu.dimension_semantics<parallel>], iteration_bounds = array<i64: 1>, scalar_prefetch = 1 : i64, scratch_operands = 0 : i64, tpu.core_type = #tpu.core_type<tc>, window_params = [{transform_indices = @transform_0, window_bounds = array<i64: 1, 1024>}, {transform_indices = @transform_1, window_bounds = array<i64: 1, 1024>}]} {
    %0 = tpu.iota {dimensions = array<i32: 0>} : vector<1x1024xi32>
    %1 = tpu.iota {dimensions = array<i32: 1>} : vector<1x1024xi32>
    %c1_i32 = arith.constant 1 : i32
    %2 = arith.muli %arg0, %c1_i32 : i32
    %3 = vector.broadcast %2 : i32 to vector<1x1024xi32>
    %4 = arith.addi %3, %0 : vector<1x1024xi32>
    %c1024_i32 = arith.constant 1024 : i32
    %5 = vector.broadcast %c1024_i32 : i32 to vector<1x1024xi32>
    %6 = arith.muli %4, %5 : vector<1x1024xi32>
    %7 = arith.addi %6, %1 : vector<1x1024xi32>
    %c0 = arith.constant 0 : index
    %8 = memref.load %arg1[%c0] : memref<1xi32, #tpu.memory_space<smem>>
    %c-1640531527_i32 = arith.constant -1640531527 : i32
    %9 = arith.muli %8, %c-1640531527_i32 : i32
    %10 = vector.broadcast %9 : i32 to vector<1x1024xi32>
    %11 = arith.xori %7, %10 : vector<1x1024xi32>
    %c16_i32 = arith.constant 16 : i32
    %12 = vector.broadcast %c16_i32 : i32 to vector<1x1024xi32>
    %13 = arith.shrui %11, %12 : vector<1x1024xi32>
    %14 = arith.xori %11, %13 : vector<1x1024xi32>
    %c2146121005_i32 = arith.constant 2146121005 : i32
    %15 = vector.broadcast %c2146121005_i32 : i32 to vector<1x1024xi32>
    %16 = arith.muli %14, %15 : vector<1x1024xi32>
    %c15_i32 = arith.constant 15 : i32
    %17 = vector.broadcast %c15_i32 : i32 to vector<1x1024xi32>
    %18 = arith.shrui %16, %17 : vector<1x1024xi32>
    %19 = arith.xori %16, %18 : vector<1x1024xi32>
    %c-2073254261_i32 = arith.constant -2073254261 : i32
    %20 = vector.broadcast %c-2073254261_i32 : i32 to vector<1x1024xi32>
    %21 = arith.muli %19, %20 : vector<1x1024xi32>
    %c16_i32_0 = arith.constant 16 : i32
    %22 = vector.broadcast %c16_i32_0 : i32 to vector<1x1024xi32>
    %23 = arith.shrui %21, %22 : vector<1x1024xi32>
    %24 = arith.xori %21, %23 : vector<1x1024xi32>
    %c-2147483648_i32 = arith.constant -2147483648 : i32
    %25 = vector.broadcast %c-2147483648_i32 : i32 to vector<1x1024xi32>
    %26 = arith.cmpi ult, %24, %25 : vector<1x1024xi32>
    %c0_1 = arith.constant 0 : index
    %c0_2 = arith.constant 0 : index
    %27 = vector.load %arg2[%c0_1, %c0_2] : memref<1x1024xf32, #tpu.memory_space<vmem>>, vector<1x1024xf32>
    %cst = arith.constant 2.000000e+00 : f32
    %28 = vector.broadcast %cst : f32 to vector<1x1024xf32>
    %29 = arith.mulf %27, %28 : vector<1x1024xf32>
    %cst_3 = arith.constant 0.000000e+00 : f32
    %30 = vector.broadcast %cst_3 : f32 to vector<1x1024xf32>
    %31 = arith.select %26, %29, %30 : vector<1x1024xi1>, vector<1x1024xf32>
    %c0_4 = arith.constant 0 : index
    %c0_5 = arith.constant 0 : index
    %32 = vector.load %arg3[%c0_4, %c0_5] : memref<1x1024xf32, #tpu.memory_space<vmem>>, vector<1x1024xf32>
    tpu.vector_store %arg3[%c0_4, %c0_5], %31 {strides = array<i32>} : memref<1x1024xf32, #tpu.memory_space<vmem>>, vector<1x1024xf32>,
    return
  }
  func.func @transform_0(%arg0: i32, %arg1: memref<1xi32, #tpu.memory_space<smem>>) -> (i32, i32) {
    %c0_i32 = arith.constant 0 : i32
    %c0_i32_0 = arith.constant 0 : i32
    return %arg0, %c0_i32 : i32, i32
  }
  func.func @transform_1(%arg0: i32, %arg1: memref<1xi32, #tpu.memory_space<smem>>) -> (i32, i32) {
    %c0_i32 = arith.constant 0 : i32
    %c0_i32_0 = arith.constant 0 : i32
    return %arg0, %c0_i32 : i32, i32
  }
}

</mosaic_0001>

<llo_original>
// kernel: tpu_custom_call.1
$region0: #{tpu_custom_call.1}
  #allocation0 [shape = 'u32[]', space=smem, size = 0x4, offset = 0x4, fixed_abs, tag = 'smem constant byte address 0x4 - core index']
  #allocation1 [shape = 'u32[144,128]{1,0:T(1,128)}', space=vmem, size = 0x12000, scoped, tag = 'internal scratch']
  #allocation2 [shape = 's32[1]{0}', space=sflag, size = 0x4, scoped, tag = 'scoped memory for tpu_custom_call.1']
  #allocation3 [shape = 's32[1]{0:T(128)S(6)}', space=smem, size = 0x200, scoped, tag = 'prefetched SMEM operand 0']
  %s0 = inlined_call_operand.<no memory space> [shape: s32[1], index: 0, kind: input, shape index: {}]
  %s1 = inlined_call_operand.hbm [shape: f32[1,1024], index: 1, kind: input, shape index: {}]
  %s2 = inlined_call_operand.hbm [shape: f32[1,1024], index: 2, kind: output, shape index: {}]
  %s3 = sld [smem:[#allocation0]]
  $region18: #{tpu_custom_call.1} parent=0
    _
  %s5 = ssub.s32 1, %s3
  %s6 = scalar_select 0, %s5, %s3
  %7 = sst [smem:[#allocation3]] %s0
  $region1: #{tpu_custom_call.1} parent=0
    #allocation4 [shape = 'u8[4096]{0}', space=vmem, size = 0x1000, scoped, tag = 'input window, operand 1, single buffered']
    #allocation5 [shape = 's32[1]{0}', space=sflag, size = 0x4, scoped, tag = 'scoped memory for tpu_custom_call.1']
    #allocation6 [shape = 's32[1]{0}', space=sflag, size = 0x4, scoped, tag = 'scoped memory for tpu_custom_call.1']
    #allocation7 [shape = 'u8[4096]{0}', space=vmem, size = 0x1000, scoped, tag = 'output window, operand 0, single buffered']
    %8 = vsyncpa [#allocation5], 0
    %9 = vsyncpa [#allocation6], 0
    // Predicated region
    $region2: #{tpu_custom_call.1} parent=1 // pred_check
      _
    $region3: #{tpu_custom_call.1} parent=1 // pred_check_branch
      %11 = sbr.rel (0) target = $region5
    $region4: #{tpu_custom_call.1} parent=1 // pred_region
      %s13 = ssub.s32 128, 128
      %14 = vsyncadd [#allocation5], %s13
      %s16 = sshll.u32 [#allocation4], 4
      %s17 = int_to_ptr.vmem [resolvable:$true] %s16
      %19 = dma.hbm_to_vmem [thread:$0]  %s1, 128, %s17, [#allocation5]
    $region5: #{tpu_custom_call.1} parent=1 // pred_fallthru
      _
    // Predicated region
    $region6: #{tpu_custom_call.1} parent=1 // pred_check
      _
    $region7: #{tpu_custom_call.1} parent=1 // pred_check_branch
      %21 = sbr.rel (0) target = $region9
    $region8: #{tpu_custom_call.1} parent=1 // pred_region
      %22 = dma.done [#allocation5], 128
    $region9: #{tpu_custom_call.1} parent=1 // pred_fallthru
      _
    %v23 = vlaneseq
    %v24 = vshrl.u32 %v23, 7
    %v25 = vlaneseq
    %v26 = vand.u32 %v25, 127
    %v27 = vadd.s32 %v26, 128
    %v28 = vadd.s32 %v26, 256
    %v29 = vadd.s32 %v26, 384
    %v30 = vadd.s32 %v26, 512
    %v31 = vadd.s32 %v26, 640
    %v32 = vadd.s32 %v26, 768
    %v33 = vadd.s32 %v26, 896
    %v34 = vstv 0
    %v35 = vadd.s32 %v34, %v24
    %v36 = vmul.u32 %v35, 1024
    %v37 = vadd.s32 %v36, %v26
    %v38 = vadd.s32 %v36, %v27
    %v39 = vadd.s32 %v36, %v28
    %v40 = vadd.s32 %v36, %v29
    %v41 = vadd.s32 %v36, %v30
    %v42 = vadd.s32 %v36, %v31
    %v43 = vadd.s32 %v36, %v32
    %v44 = vadd.s32 %v36, %v33
    %s45 = sld [smem:[#allocation3]]
    %s46 = smul.u32 %s45, 2654435769
    %v47 = vstv %s46
    %v48 = vxor.u32 %v37, %v47
    %v49 = vxor.u32 %v38, %v47
    %v50 = vxor.u32 %v39, %v47
    %v51 = vxor.u32 %v40, %v47
    %v52 = vxor.u32 %v41, %v47
    %v53 = vxor.u32 %v42, %v47
    %v54 = vxor.u32 %v43, %v47
    %v55 = vxor.u32 %v44, %v47
    %v56 = vshrl.u32 %v48, 16
    %v57 = vshrl.u32 %v49, 16
    %v58 = vshrl.u32 %v50, 16
    %v59 = vshrl.u32 %v51, 16
    %v60 = vshrl.u32 %v52, 16
    %v61 = vshrl.u32 %v53, 16
    %v62 = vshrl.u32 %v54, 16
    %v63 = vshrl.u32 %v55, 16
    %v64 = vxor.u32 %v48, %v56
    %v65 = vxor.u32 %v49, %v57
    %v66 = vxor.u32 %v50, %v58
    %v67 = vxor.u32 %v51, %v59
    %v68 = vxor.u32 %v52, %v60
    %v69 = vxor.u32 %v53, %v61
    %v70 = vxor.u32 %v54, %v62
    %v71 = vxor.u32 %v55, %v63
    %v72 = vmul.u32 %v64, 2146121005
    %v73 = vmul.u32 %v65, 2146121005
    %v74 = vmul.u32 %v66, 2146121005
    %v75 = vmul.u32 %v67, 2146121005
    %v76 = vmul.u32 %v68, 2146121005
    %v77 = vmul.u32 %v69, 2146121005
    %v78 = vmul.u32 %v70, 2146121005
    %v79 = vmul.u32 %v71, 2146121005
    %v80 = vshrl.u32 %v72, 15
    %v81 = vshrl.u32 %v73, 15
    %v82 = vshrl.u32 %v74, 15
    %v83 = vshrl.u32 %v75, 15
    %v84 = vshrl.u32 %v76, 15
    %v85 = vshrl.u32 %v77, 15
    %v86 = vshrl.u32 %v78, 15
    %v87 = vshrl.u32 %v79, 15
    %v88 = vxor.u32 %v72, %v80
    %v89 = vxor.u32 %v73, %v81
    %v90 = vxor.u32 %v74, %v82
    %v91 = vxor.u32 %v75, %v83
    %v92 = vxor.u32 %v76, %v84
    %v93 = vxor.u32 %v77, %v85
    %v94 = vxor.u32 %v78, %v86
    %v95 = vxor.u32 %v79, %v87
    %v96 = vmul.u32 %v88, 2221713035
    %v97 = vmul.u32 %v89, 2221713035
    %v98 = vmul.u32 %v90, 2221713035
    %v99 = vmul.u32 %v91, 2221713035
    %v100 = vmul.u32 %v92, 2221713035
    %v101 = vmul.u32 %v93, 2221713035
    %v102 = vmul.u32 %v94, 2221713035
    %v103 = vmul.u32 %v95, 2221713035
    %v104 = vshrl.u32 %v96, 16
    %v105 = vshrl.u32 %v97, 16
    %v106 = vshrl.u32 %v98, 16
    %v107 = vshrl.u32 %v99, 16
    %v108 = vshrl.u32 %v100, 16
    %v109 = vshrl.u32 %v101, 16
    %v110 = vshrl.u32 %v102, 16
    %v111 = vshrl.u32 %v103, 16
    %v112 = vxor.u32 %v96, %v104
    %v113 = vxor.u32 %v97, %v105
    %v114 = vxor.u32 %v98, %v106
    %v115 = vxor.u32 %v99, %v107
    %v116 = vxor.u32 %v100, %v108
    %v117 = vxor.u32 %v101, %v109
    %v118 = vxor.u32 %v102, %v110
    %v119 = vxor.u32 %v103, %v111
    %vm120 = vcmp.lt.u32.totalorder %v112, 2147483648
    %vm121 = vcmp.lt.u32.totalorder %v113, 2147483648
    %vm122 = vcmp.lt.u32.totalorder %v114, 2147483648
    %vm123 = vcmp.lt.u32.totalorder %v115, 2147483648
    %vm124 = vcmp.lt.u32.totalorder %v116, 2147483648
    %vm125 = vcmp.lt.u32.totalorder %v117, 2147483648
    %vm126 = vcmp.lt.u32.totalorder %v118, 2147483648
    %vm127 = vcmp.lt.u32.totalorder %v119, 2147483648
    %v128 = vld [vmem:[#allocation4] sm:$0xff]
    %v129 = vmul.f32 %v128, 2.0
    %v131 = vlaneseq
    %v132 = vshrl.u32 %v131, 7
    %v133 = vsub.s32 0, %v132
    %v134 = vrot.slane %v129, %v133
    %v135 = vlaneseq
    %v136 = vshrl.u32 %v135, 7
    %v137 = vsub.s32 1, %v136
    %v138 = vrot.slane %v129, %v137
    %v139 = vlaneseq
    %v140 = vshrl.u32 %v139, 7
    %v141 = vsub.s32 2, %v140
    %v142 = vrot.slane %v129, %v141
    %v143 = vlaneseq
    %v144 = vshrl.u32 %v143, 7
    %v145 = vsub.s32 3, %v144
    %v146 = vrot.slane %v129, %v145
    %v147 = vlaneseq
    %v148 = vshrl.u32 %v147, 7
    %v149 = vsub.s32 4, %v148
    %v150 = vrot.slane %v129, %v149
    %v151 = vlaneseq
    %v152 = vshrl.u32 %v151, 7
    %v153 = vsub.s32 5, %v152
    %v154 = vrot.slane %v129, %v153
    %v155 = vlaneseq
    %v156 = vshrl.u32 %v155, 7
    %v157 = vsub.s32 6, %v156
    %v158 = vrot.slane %v129, %v157
    %v159 = vlaneseq
    %v160 = vshrl.u32 %v159, 7
    %v161 = vsub.s32 7, %v160
    %v162 = vrot.slane %v129, %v161
    %v171 = vsel %vm120, %v134, 0.0
    %v172 = vsel %vm121, %v138, 0.0
    %v173 = vsel %vm122, %v142, 0.0
    %v174 = vsel %vm123, %v146, 0.0
    %v175 = vsel %vm124, %v150, 0.0
    %v176 = vsel %vm125, %v154, 0.0
    %v177 = vsel %vm126, %v158, 0.0
    %v178 = vsel %vm127, %v162, 0.0
    %v187 = vcombine.low %v171, %v172
    %v188 = vcombine.low %v173, %v174
    %v189 = vcombine.low %v175, %v176
    %v190 = vcombine.low %v177, %v178
    %v192 = vunpack.c.l.s4 1966171168
    %v193 = vunpack.c.0.s8 %v192
    %v194 = vlaneseq
    %v195 = vshrl.u32 %v194, 7
    %v196 = vsub.s32 %v193, %v195
    %v197 = vrot.slane %v187, %v196
    %v199 = vunpack.c.l.s4 1966171168
    %v200 = vunpack.c.0.s8 %v199
    %v201 = vlaneseq
    %v202 = vshrl.u32 %v201, 7
    %v203 = vsub.s32 %v200, %v202
    %v204 = vrot.slane %v188, %v203
    %v206 = vunpack.c.l.s4 1966171168
    %v207 = vunpack.c.0.s8 %v206
    %v208 = vlaneseq
    %v209 = vshrl.u32 %v208, 7
    %v210 = vsub.s32 %v207, %v209
    %v211 = vrot.slane %v189, %v210
    %v213 = vunpack.c.l.s4 1966171168
    %v214 = vunpack.c.0.s8 %v213
    %v215 = vlaneseq
    %v216 = vshrl.u32 %v215, 7
    %v217 = vsub.s32 %v214, %v216
    %v218 = vrot.slane %v190, %v217
    %v219 = vcombine.low %v197, %v204
    %v220 = vcombine.low %v211, %v218
    %v222 = vunpack.c.l.s4 1966171168
    %v223 = vunpack.c.0.s8 %v222
    %v224 = vlaneseq
    %v225 = vshrl.u32 %v224, 7
    %v226 = vsub.s32 %v223, %v225
    %v227 = vrot.slane %v219, %v226
    %v229 = vunpack.c.l.s4 1966171168
    %v230 = vunpack.c.0.s8 %v229
    %v231 = vlaneseq
    %v232 = vshrl.u32 %v231, 7
    %v233 = vsub.s32 %v230, %v232
    %v234 = vrot.slane %v220, %v233
    %v235 = vcombine.low %v227, %v234
    %237 = vst [vmem:[#allocation7] sm:$0xff] %v235
    // Predicated region
    $region10: #{tpu_custom_call.1} parent=1 // pred_check
      _
    $region11: #{tpu_custom_call.1} parent=1 // pred_check_branch
      %239 = sbr.rel (0) target = $region13
    $region12: #{tpu_custom_call.1} parent=1 // pred_region
      %s241 = ssub.s32 128, 128
      %242 = vsyncadd [#allocation6], %s241
      %s244 = sshll.u32 [#allocation7], 4
      %s245 = int_to_ptr.vmem [resolvable:$true] %s244
      %247 = dma.vmem_to_hbm [thread:$0]  %s245, 128, %s2, [#allocation6]
    $region13: #{tpu_custom_call.1} parent=1 // pred_fallthru
      _
    // Predicated region
    $region14: #{tpu_custom_call.1} parent=1 // pred_check
      _
    $region15: #{tpu_custom_call.1} parent=1 // pred_check_branch
      %249 = sbr.rel (0) target = $region17
    $region16: #{tpu_custom_call.1} parent=1 // pred_region
      %250 = dma.done [#allocation6], 128
    $region17: #{tpu_custom_call.1} parent=1 // pred_fallthru
      _
    %251 = vsyncpa [#allocation5], 1
    %252 = vsyncpa [#allocation6], 1

</llo_original>
